<compile_context>
chip_gen: v6e
topology: v6e:2x2x1
jax: 0.10.0
libtpu: 0.0.40
codegen_flags: <defaults>
</compile_context>

<pallas_src>
import math

import jax
import jax.numpy as jnp
from jax.experimental import pallas as pl
from jax.experimental.pallas import tpu as pltpu

_LANE = 128


def _round_up(x, m):
    return (x + m - 1) // m * m


def _cdiv(a, b):
    return -(-a // b)


def _tpu_target():
    """Returns (wide_mxu, vmem_capacity_bytes) for the local TPU, with safe fallbacks."""
    kind = ""
    try:
        kind = jax.devices()[0].device_kind.lower()
    except Exception:
        pass
    wide_mxu = any(tag in kind for tag in ("v6", "v7", "7x"))   # 256-wide MXU gens
    vmem_cap = None
    try:
        vmem_cap = int(pltpu.get_tpu_info().vmem_capacity_bytes)
    except Exception:
        vmem_cap = None
    if vmem_cap is None or vmem_cap <= 0:
        vmem_cap = (64 << 20) if ("v7" in kind or "7x" in kind) else (128 << 20)
    return wide_mxu, vmem_cap


def _vmem_tile_bytes(shape, itemsize):
    """Pessimistic VMEM footprint of one block (minor dim padded to 128 lanes,
    2nd-minor to 8 sublanes)."""
    s = list(shape)
    s[-1] = _round_up(int(s[-1]), _LANE)
    if len(s) >= 2:
        s[-2] = _round_up(int(s[-2]), 8)
    n = 1
    for d in s:
        n *= int(d)
    return n * itemsize


def _conv_bias_relu_kernel(x_ref, w_ref, b_ref, o_ref):
    """One (batch, cout-tile, row-tile) output tile per grid step.

    x_ref: (1, Hp, Wx, Ck)     padded (possibly width-unfolded) input image;
                               resident in VMEM across the c/r grid axes.
    w_ref: (KT, Ck, TN)        weight slabs (KT = KH if width taps are folded
                               into the contraction Ck, else KH*KW).
    b_ref: (1, TN)             bias slice (f32).
    o_ref: (1, TH, Wo, TN)     output tile.
    """
    _, TH, Wo, TN = o_ref.shape
    _, _, Wx, Ck = x_ref.shape
    KWr = Wx - Wo + 1                 # remaining (un-folded) width taps
    KH = w_ref.shape[0] // KWr

    row0 = pl.multiple_of(pl.program_id(2) * TH, TH)   # first output row of tile

    acc = jnp.zeros((TH * Wo, TN), jnp.float32)
    for kh in range(KH):
        # One contiguous row-window load per tap row.
        xrow = x_ref[0, pl.ds(row0 + kh, TH), :, :]            # (TH, Wx, Ck)
        for kw in range(KWr):
            # Folded path (KWr == 1): no per-tap slicing at all -- a single
            # reshape + one matmul per kh with K = KW*Cin_p of real data.
            patch = xrow if KWr == 1 else xrow[:, kw:kw + Wo, :]
            acc += jnp.dot(patch.reshape(TH * Wo, Ck),
                           w_ref[kh * KWr + kw],
                           preferred_element_type=jnp.float32)

    acc = acc + b_ref[...].astype(jnp.float32)                 # bias
    acc = jnp.maximum(acc, 0.0)                                # ReLU (f32 epilogue)
    o_ref[...] = acc.reshape(1, TH, Wo, TN).astype(o_ref.dtype)


def conv_module_forward_nhwc(x_nhwc, w_hwio, bias, *, padding=0,
                             compute_dtype=None):
    """relu(conv2d(x) + bias) on NHWC activations / HWIO weights.

    Pass compute_dtype=jnp.bfloat16 on v5e/v6e/v7x to feed the MXU bf16
    operands (accumulation stays f32).  Default keeps the input dtype.
    """
    B, H, W, Cin = x_nhwc.shape
    KH, KW, wcin, Cout = w_hwio.shape
    assert wcin == Cin
    out_dtype = x_nhwc.dtype
    cdt = jnp.dtype(compute_dtype) if compute_dtype is not None else jnp.dtype(x_nhwc.dtype)

    Ho = H + 2 * padding - KH + 1
    Wo = W + 2 * padding - KW + 1
    assert Ho > 0 and Wo > 0

    wide_mxu, vmem_cap = _tpu_target()
    vmem_budget = int(vmem_cap * 0.85)       # ~108 MiB on v5e/v6e, ~54 MiB on v7x

    # Contraction (Cin) padded only to the dtype packing multiple, not 128.
    pack = 8 if cdt.itemsize >= 4 else 32 // cdt.itemsize      # 8 f32, 16 bf16
    Cin_p = _round_up(Cin, pack)
    # Lane-dense Cout tile; 256-wide on v6e/v7x only when Cout can fill it.
    TN = min(_round_up(Cout, _LANE), 256 if wide_mxu else _LANE)
    Cout_p = _round_up(Cout, TN)
    CT = Cout_p // TN

    # Row tile: target an MXU-friendly M (~128 im2row rows), then shrink if the
    # total grid would be too small to shard across 2 TCs / hide DMAs.
    TH = max(1, min(Ho, max(1, 128 // max(1, Wo))))
    while TH > 1 and B * CT * _cdiv(Ho, TH) < 8:
        TH = max(1, TH // 2)
    Ho_p = _round_up(Ho, TH)
    R = Ho_p // TH

    Hp = Ho_p + KH - 1                        # padded input height (halo + row tiling)
    Wp = W + 2 * padding

    # Single fused pad + cast of the input.
    x_pad = jnp.pad(
        x_nhwc,
        ((0, 0),
         (padding, Hp - H - padding),
         (padding, padding),
         (0, Cin_p - Cin)),
    ).astype(cdt)
    w_pad = jnp.pad(
        w_hwio,
        ((0, 0), (0, 0), (0, Cin_p - Cin), (0, Cout_p - Cout)),
    ).astype(cdt)
    b = jnp.pad(bias, (0, Cout_p - Cout)).astype(jnp.float32).reshape(1, Cout_p)

    # Small channel counts: fold the KW taps into the contraction so the MXU K
    # dimension is mostly useful data (one dot per kh, K = KW*Cin_p).  The
    # width-unfold is a cheap pass over a tiny tensor; large-Cin convs skip it.
    fold_w = Cin_p < _LANE
    if fold_w:
        x_in = jnp.concatenate(
            [x_pad[:, :, kw:kw + Wo, :] for kw in range(KW)], axis=-1)
        Wx, Ck = Wo, KW * Cin_p
        w_in = w_pad.reshape(KH, KW * Cin_p, Cout_p)
        KT = KH
    else:
        x_in = x_pad
        Wx, Ck = Wp, Cin_p
        w_in = w_pad.reshape(KH * KW, Cin_p, Cout_p)
        KT = KH * KW

    # Generation-aware scoped-VMEM budget sized from the actual blocks.
    itm = cdt.itemsize
    x_blk = _vmem_tile_bytes((1, Hp, Wx, Ck), itm)
    w_blk = _vmem_tile_bytes((KT, Ck, TN), itm)
    b_blk = _vmem_tile_bytes((1, TN), 4)
    o_blk = _vmem_tile_bytes((1, TH, Wo, TN), jnp.dtype(out_dtype).itemsize)
    headroom = 4 << 20
    need_db = 2 * x_blk + 2 * (w_blk + b_blk + o_blk) + headroom
    # x only changes with the batch index; single-buffer it when double
    # buffering would not fit the per-generation budget (v7x: 64 MiB VMEM).
    single_buffer_x = need_db > vmem_budget
    x_bufs = 1 if single_buffer_x else 2
    need = x_bufs * x_blk + 2 * (w_blk + b_blk + o_blk) + headroom
    vmem_limit = int(min(max(need, 32 << 20), vmem_budget))

    x_spec_kwargs = {}
    if single_buffer_x:
        x_spec_kwargs["pipeline_mode"] = pl.Buffered(1)

    out_p = pl.pallas_call(
        _conv_bias_relu_kernel,
        out_shape=jax.ShapeDtypeStruct((B, Ho_p, Wo, Cout_p), out_dtype),
        grid_spec=pltpu.PrefetchScalarGridSpec(
            num_scalar_prefetch=0,
            grid=(B, CT, R),                  # b outer, cout tile, row tile inner
            in_specs=[
                pl.BlockSpec((1, Hp, Wx, Ck),
                             lambda bi, c, r: (bi, 0, 0, 0),
                             **x_spec_kwargs),
                pl.BlockSpec((KT, Ck, TN), lambda bi, c, r: (0, 0, c)),
                pl.BlockSpec((1, TN), lambda bi, c, r: (0, c)),
            ],
            out_specs=pl.BlockSpec((1, TH, Wo, TN), lambda bi, c, r: (bi, r, 0, c)),
        ),
        compiler_params=pltpu.CompilerParams(
            dimension_semantics=("parallel", "parallel", "parallel"),
            vmem_limit_bytes=vmem_limit,
        ),
    )(x_in, w_in, b)

    # Strip channel / row padding.
    return out_p[:, :Ho, :, :Cout]


def conv_module_forward(x_nchw, weight_oihw, bias, *, padding=0,
                        compute_dtype=None):
    """PyTorch-layout (NCHW / OIHW) convenience wrapper around the NHWC path."""
    x = jnp.transpose(x_nchw, (0, 2, 3, 1))          # NCHW -> NHWC
    w = jnp.transpose(weight_oihw, (2, 3, 1, 0))     # OIHW -> HWIO
    out = conv_module_forward_nhwc(x, w, bias, padding=padding,
                                   compute_dtype=compute_dtype)
    return jnp.transpose(out, (0, 3, 1, 2))          # NHWC -> NCHW


def init_conv_module_params(key, in_channels, out_channels, kernel_size):
    """Deterministic init matching ConvModule.init_weights():
    kaiming_normal_(mode='fan_out', nonlinearity='relu') for weight, zeros bias."""
    fan_out = out_channels * kernel_size * kernel_size
    std = math.sqrt(2.0) / math.sqrt(fan_out)
    weight = std * jax.random.normal(
        key, (out_channels, in_channels, kernel_size, kernel_size), jnp.float32)
    bias = jnp.zeros((out_channels,), jnp.float32)
    return weight, bias


if __name__ == "__main__":
    key = jax.random.PRNGKey(0)
    kx, kw_key = jax.random.split(key)

    B, Cin, H, W = 2, 4, 16, 16
    Cout, K, pad = 8, 3, 1

    x = jax.random.normal(kx, (B, Cin, H, W), jnp.float32)
    weight, bias = init_conv_module_params(kw_key, Cin, Cout, K)

    # Pure-JAX reference (conv + bias + relu).
    ref = jax.lax.conv_general_dilated(
        x, weight, window_strides=(1, 1), padding=((pad, pad), (pad, pad)),
        dimension_numbers=("NCHW", "OIHW", "NCHW"))
    ref = jnp.maximum(ref + bias[None, :, None, None], 0.0)

    # f32 path (tight tolerance).
    out = conv_module_forward(x, weight, bias, padding=pad)
    out = jax.block_until_ready(out)
    assert out.shape == (B, Cout, H, W), out.shape
    assert jnp.allclose(out, ref, atol=1e-4, rtol=1e-4), \
        float(jnp.max(jnp.abs(out - ref)))

    # bf16 MXU-operand path (f32 accumulation) -- looser tolerance.
    out_bf16 = conv_module_forward(x, weight, bias, padding=pad,
                                   compute_dtype=jnp.bfloat16)
    out_bf16 = jax.block_until_ready(out_bf16)
    assert out_bf16.shape == (B, Cout, H, W), out_bf16.shape
    assert jnp.allclose(out_bf16, ref, atol=1e-1, rtol=1e-1), \
        float(jnp.max(jnp.abs(out_bf16 - ref)))

    print("KERNEL_OK")
</pallas_src>

<mosaic_0001>
module attributes {stable_mosaic.version = 11 : i64} {
  func.func @_conv_bias_relu_kernel(%arg0: i32, %arg1: i32, %arg2: i32, %arg3: memref<1x18x16x24xf32, #tpu.memory_space<vmem>>, %arg4: memref<3x24x128xf32, #tpu.memory_space<vmem>>, %arg5: memref<1x128xf32, #tpu.memory_space<vmem>>, %arg6: memref<1x4x16x128xf32, #tpu.memory_space<vmem>>) attributes {dimension_semantics = [#tpu.dimension_semantics<parallel>, #tpu.dimension_semantics<parallel>, #tpu.dimension_semantics<parallel>], iteration_bounds = array<i64: 2, 1, 4>, scalar_prefetch = 0 : i64, scratch_operands = 0 : i64, tpu.core_type = #tpu.core_type<tc>, window_params = [{transform_indices = @transform_0, window_bounds = array<i64: 1, 18, 16, 24>}, {transform_indices = @transform_1, window_bounds = array<i64: 3, 24, 128>}, {transform_indices = @transform_2, window_bounds = array<i64: 1, 128>}, {transform_indices = @transform_3, window_bounds = array<i64: 1, 4, 16, 128>}]} {
    %c4_i32 = arith.constant 4 : i32
    %0 = arith.muli %arg2, %c4_i32 : i32
    %1 = tpu.assume_multiple %0, 4 : i32
    %cst = arith.constant 0.000000e+00 : f32
    %2 = vector.broadcast %cst : f32 to vector<64x128xf32>
    %c0_i32 = arith.constant 0 : i32
    %3 = arith.addi %1, %c0_i32 : i32
    %c0 = arith.constant 0 : index
    %4 = arith.index_cast %3 : i32 to index
    %c0_0 = arith.constant 0 : index
    %c0_1 = arith.constant 0 : index
    %5 = vector.load %arg3[%c0, %4, %c0_0, %c0_1] : memref<1x18x16x24xf32, #tpu.memory_space<vmem>>, vector<1x4x16x24xf32>
    %6 = vector.shape_cast %5 : vector<1x4x16x24xf32> to vector<4x16x24xf32>
    %7 = vector.shape_cast %6 : vector<4x16x24xf32> to vector<64x24xf32>
    %c0_2 = arith.constant 0 : index
    %c0_3 = arith.constant 0 : index
    %c0_4 = arith.constant 0 : index
    %8 = vector.load %arg4[%c0_2, %c0_3, %c0_4] : memref<3x24x128xf32, #tpu.memory_space<vmem>>, vector<1x24x128xf32>
    %9 = vector.shape_cast %8 : vector<1x24x128xf32> to vector<24x128xf32>
    %cst_5 = arith.constant dense<0.000000e+00> : vector<64x128xf32>
    %10 = tpu.matmul %7, %9, %cst_5 {dimension_numbers = #tpu.dot_dimension_numbers<[1], [0], [0], [1], [0, 0, 1, 1], [], []>} : vector<64x24xf32>, vector<24x128xf32>, vector<64x128xf32> -> vector<64x128xf32>
    %11 = arith.addf %2, %10 : vector<64x128xf32>
    %c1_i32 = arith.constant 1 : i32
    %12 = arith.addi %1, %c1_i32 : i32
    %c0_6 = arith.constant 0 : index
    %13 = arith.index_cast %12 : i32 to index
    %c0_7 = arith.constant 0 : index
    %c0_8 = arith.constant 0 : index
    %14 = vector.load %arg3[%c0_6, %13, %c0_7, %c0_8] : memref<1x18x16x24xf32, #tpu.memory_space<vmem>>, vector<1x4x16x24xf32>
    %15 = vector.shape_cast %14 : vector<1x4x16x24xf32> to vector<4x16x24xf32>
    %16 = vector.shape_cast %15 : vector<4x16x24xf32> to vector<64x24xf32>
    %c1 = arith.constant 1 : index
    %c0_9 = arith.constant 0 : index
    %c0_10 = arith.constant 0 : index
    %17 = vector.load %arg4[%c1, %c0_9, %c0_10] : memref<3x24x128xf32, #tpu.memory_space<vmem>>, vector<1x24x128xf32>
    %18 = vector.shape_cast %17 : vector<1x24x128xf32> to vector<24x128xf32>
    %cst_11 = arith.constant dense<0.000000e+00> : vector<64x128xf32>
    %19 = tpu.matmul %16, %18, %cst_11 {dimension_numbers = #tpu.dot_dimension_numbers<[1], [0], [0], [1], [0, 0, 1, 1], [], []>} : vector<64x24xf32>, vector<24x128xf32>, vector<64x128xf32> -> vector<64x128xf32>
    %20 = arith.addf %11, %19 : vector<64x128xf32>
    %c2_i32 = arith.constant 2 : i32
    %21 = arith.addi %1, %c2_i32 : i32
    %c0_12 = arith.constant 0 : index
    %22 = arith.index_cast %21 : i32 to index
    %c0_13 = arith.constant 0 : index
    %c0_14 = arith.constant 0 : index
    %23 = vector.load %arg3[%c0_12, %22, %c0_13, %c0_14] : memref<1x18x16x24xf32, #tpu.memory_space<vmem>>, vector<1x4x16x24xf32>
    %24 = vector.shape_cast %23 : vector<1x4x16x24xf32> to vector<4x16x24xf32>
    %25 = vector.shape_cast %24 : vector<4x16x24xf32> to vector<64x24xf32>
    %c2 = arith.constant 2 : index
    %c0_15 = arith.constant 0 : index
    %c0_16 = arith.constant 0 : index
    %26 = vector.load %arg4[%c2, %c0_15, %c0_16] : memref<3x24x128xf32, #tpu.memory_space<vmem>>, vector<1x24x128xf32>
    %27 = vector.shape_cast %26 : vector<1x24x128xf32> to vector<24x128xf32>
    %cst_17 = arith.constant dense<0.000000e+00> : vector<64x128xf32>
    %28 = tpu.matmul %25, %27, %cst_17 {dimension_numbers = #tpu.dot_dimension_numbers<[1], [0], [0], [1], [0, 0, 1, 1], [], []>} : vector<64x24xf32>, vector<24x128xf32>, vector<64x128xf32> -> vector<64x128xf32>
    %29 = arith.addf %20, %28 : vector<64x128xf32>
    %c0_18 = arith.constant 0 : index
    %c0_19 = arith.constant 0 : index
    %30 = vector.load %arg5[%c0_18, %c0_19] : memref<1x128xf32, #tpu.memory_space<vmem>>, vector<1x128xf32>
    %31 = vector.broadcast %30 : vector<1x128xf32> to vector<64x128xf32>
    %32 = arith.addf %29, %31 : vector<64x128xf32>
    %cst_20 = arith.constant 0.000000e+00 : f32
    %33 = vector.broadcast %cst_20 : f32 to vector<64x128xf32>
    %34 = arith.maximumf %32, %33 : vector<64x128xf32>
    %35 = vector.shape_cast %34 : vector<64x128xf32> to vector<1x4x16x128xf32>
    %c0_21 = arith.constant 0 : index
    %c0_22 = arith.constant 0 : index
    %c0_23 = arith.constant 0 : index
    %c0_24 = arith.constant 0 : index
    %36 = vector.load %arg6[%c0_21, %c0_22, %c0_23, %c0_24] : memref<1x4x16x128xf32, #tpu.memory_space<vmem>>, vector<1x4x16x128xf32>
    tpu.vector_store %arg6[%c0_21, %c0_22, %c0_23, %c0_24], %35 {strides = array<i32>} : memref<1x4x16x128xf32, #tpu.memory_space<vmem>>, vector<1x4x16x128xf32>,
    return
  }
  func.func @transform_0(%arg0: i32, %arg1: i32, %arg2: i32) -> (i32, i32, i32, i32) {
    %c0_i32 = arith.constant 0 : i32
    %c0_i32_0 = arith.constant 0 : i32
    %c0_i32_1 = arith.constant 0 : i32
    %c0_i32_2 = arith.constant 0 : i32
    return %arg0, %c0_i32, %c0_i32_0, %c0_i32_1 : i32, i32, i32, i32
  }
  func.func @transform_1(%arg0: i32, %arg1: i32, %arg2: i32) -> (i32, i32, i32) {
    %c0_i32 = arith.constant 0 : i32
    %c0_i32_0 = arith.constant 0 : i32
    %c0_i32_1 = arith.constant 0 : i32
    return %c0_i32, %c0_i32_0, %arg1 : i32, i32, i32
  }
  func.func @transform_2(%arg0: i32, %arg1: i32, %arg2: i32) -> (i32, i32) {
    %c0_i32 = arith.constant 0 : i32
    %c0_i32_0 = arith.constant 0 : i32
    return %c0_i32, %arg1 : i32, i32
  }
  func.func @transform_3(%arg0: i32, %arg1: i32, %arg2: i32) -> (i32, i32, i32, i32) {
    %c0_i32 = arith.constant 0 : i32
    %c0_i32_0 = arith.constant 0 : i32
    return %arg0, %arg2, %c0_i32, %arg1 : i32, i32, i32, i32
  }
}

</mosaic_0001>

<llo_original>
// kernel: tpu_custom_call.1
$region0: #{tpu_custom_call.1}
  #allocation0 [shape = 'u32[]', space=smem, size = 0x4, offset = 0x4, fixed_abs, tag = 'smem constant byte address 0x4 - core index']
  #allocation1 [shape = 'u32[144,128]{1,0:T(1,128)}', space=vmem, size = 0x12000, scoped, tag = 'internal scratch']
  %s0 = inlined_call_operand.hbm [shape: f32[2,18,16,24], index: 0, kind: input, shape index: {}]
  %s1 = inlined_call_operand.hbm [shape: f32[3,24,128], index: 1, kind: input, shape index: {}]
  %s2 = inlined_call_operand.vmem [shape: f32[1,128], index: 2, kind: input, shape index: {}]
  %s3 = inlined_call_operand.hbm [shape: f32[2,16,16,128], index: 3, kind: output, shape index: {}]
  %s4 = sld [smem:[#allocation0]]
  $region53: #{tpu_custom_call.1} parent=0
    _
  %s6 = ssub.s32 1, %s4
  %s7 = scalar_select 0, %s6, %s4
  $region1: #{tpu_custom_call.1} parent=0
    #allocation2 [shape = 'u8[294912]{0}', space=vmem, size = 0x48000, scoped, tag = 'input window, operand 0']
    #allocation3 [shape = 's32[2]{0}', space=sflag, size = 0x8, scoped, tag = 'scoped memory for tpu_custom_call.1']
    #allocation4 [shape = 's32[2]{0}', space=sflag, size = 0x8, scoped, tag = 'scoped memory for tpu_custom_call.1']
    #allocation5 [shape = 'u8[36864]{0}', space=vmem, size = 0x9000, scoped, tag = 'input window, operand 1, single buffered']
    #allocation6 [shape = 's32[1]{0}', space=sflag, size = 0x4, scoped, tag = 'scoped memory for tpu_custom_call.1']
    #allocation7 [shape = 'u8[65536]{0}', space=vmem, size = 0x10000, scoped, tag = 'output window, operand 0']
    %8 = vsyncpa [#allocation3], 0
    %s9 = scalar_lea.sflag [#allocation3], 1
    %10 = vsyncpa %s9, 0
    %11 = vsyncpa [#allocation6], 0
    %12 = vsyncpa [#allocation4], 0
    %s13 = scalar_lea.sflag [#allocation4], 1
    %14 = vsyncpa %s13, 0
    loop: start=0, step=1, limit=10
    $region2: #{tpu_custom_call.1} parent=1 // loop_pre_header
      _
    $region3: #{tpu_custom_call.1} parent=1 // loop_header
      %s16 = sphi 0, %s20
      %p17 = scmp.ge.s32.totalorder %s16, 10
      %s23 = sphi 0, %s42
      %s24 = sphi 0, %s38
      %s25 = sphi 0, %s34
      %s26 = sphi 0, %s23
      %s27 = sphi 0, %s24
      %s28 = sphi 0, %s25
      %s29 = sphi 0, %s26
      %s30 = sphi 0, %s27
      %s31 = sphi 0, %s28
      %s45 = sphi 0, %s47
      %s48 = sphi 0, %s45
      %s49 = sphi 0, %s48
      %s65 = sphi 0, %s49
      %s71 = sphi 0, %s73
      %s74 = sphi 0, %s71
      %s75 = sphi 0, %s74
      %s91 = sphi 0, %s75
      %s97 = sphi 0, %s99
      %s100 = sphi 0, %s97
      %s101 = sphi 0, %s100
      %s117 = sphi 0, %s101
      %s127 = sphi 0, %s129
      %s130 = sphi 0, %s127
      %s131 = sphi 0, %s130
      %s147 = sphi 0, %s131
    $region4: #{tpu_custom_call.1} parent=1 // loop_header_branch
      %19 = sbr.rel (%p17) target = $region8
    $region5: #{tpu_custom_call.1} parent=1 // loop_body
      %s21 = ssub.s32 %s16, 1
      %s22 = ssub.s32 %s16, 2
      %s32 = sadd.s32 1, %s25
      %p33 = scmp.ge.s32.totalorder %s32, 4
      %s34 = scalar_select %p33, 0, %s32
      %s35 = sadd.s32 1, %s24
      %s36 = scalar_select %p33, %s35, %s24
      %p37 = scmp.ge.s32.totalorder %s36, 1
      %s38 = scalar_select %p37, 0, %s36
      %s39 = sadd.s32 1, %s23
      %s40 = scalar_select %p37, %s39, %s23
      %p41 = scmp.ge.s32.totalorder %s40, 2
      %s42 = scalar_select %p41, 0, %s40
      %s43 = ssub.s32 %s23, %s42
      %p44 = scmp.eq.s32.totalorder %s43, 0
      %s46 = sadd.s32 %s45, 1
      %s47 = scalar_select %p44, %s45, %s46
      %p50 = pneg %p44
      %p51 = scmp.eq.s32.totalorder %s16, 7
      %p52 = por %p50, %p51
      %p53 = scmp.ne.s32.totalorder %s45, %s48
      %p54 = scmp.eq.s32.totalorder %s16, 0
      %p55 = por %p53, %p54
      %p56 = scmp.ne.s32.totalorder %s45, %s48
      %p57 = scmp.eq.s32.totalorder %s21, 7
      %p58 = por %p56, %p57
      %p59 = scmp.ne.s32.totalorder %s48, %s49
      %p60 = scmp.eq.s32.totalorder %s21, 0
      %p61 = por %p59, %p60
      %p62 = scmp.ne.s32.totalorder %s48, %s49
      %p63 = scmp.eq.s32.totalorder %s22, 7
      %p64 = por %p62, %p63
      %p66 = scmp.ne.s32.totalorder %s49, %s65
      %p67 = scmp.eq.s32.totalorder %s22, 0
      %p68 = por %p66, %p67
      %s69 = ssub.s32 %s24, %s38
      %p70 = scmp.eq.s32.totalorder %s69, 0
      %s72 = sadd.s32 %s71, 1
      %s73 = scalar_select %p70, %s71, %s72
      %p76 = pneg %p70
      %p77 = scmp.eq.s32.totalorder %s16, 7
      %p78 = por %p76, %p77
      %p79 = scmp.ne.s32.totalorder %s71, %s74
      %p80 = scmp.eq.s32.totalorder %s16, 0
      %p81 = por %p79, %p80
      %p82 = scmp.ne.s32.totalorder %s71, %s74
      %p83 = scmp.eq.s32.totalorder %s21, 7
      %p84 = por %p82, %p83
      %p85 = scmp.ne.s32.totalorder %s74, %s75
      %p86 = scmp.eq.s32.totalorder %s21, 0
      %p87 = por %p85, %p86
      %p88 = scmp.ne.s32.totalorder %s74, %s75
      %p89 = scmp.eq.s32.totalorder %s22, 7
      %p90 = por %p88, %p89
      %p92 = scmp.ne.s32.totalorder %s75, %s91
      %p93 = scmp.eq.s32.totalorder %s22, 0
      %p94 = por %p92, %p93
      %s95 = ssub.s32 %s24, %s38
      %p96 = scmp.eq.s32.totalorder %s95, 0
      %s98 = sadd.s32 %s97, 1
      %s99 = scalar_select %p96, %s97, %s98
      %p102 = pneg %p96
      %p103 = scmp.eq.s32.totalorder %s16, 7
      %p104 = por %p102, %p103
      %p105 = scmp.ne.s32.totalorder %s97, %s100
      %p106 = scmp.eq.s32.totalorder %s16, 0
      %p107 = por %p105, %p106
      %p108 = scmp.ne.s32.totalorder %s97, %s100
      %p109 = scmp.eq.s32.totalorder %s21, 7
      %p110 = por %p108, %p109
      %p111 = scmp.ne.s32.totalorder %s100, %s101
      %p112 = scmp.eq.s32.totalorder %s21, 0
      %p113 = por %p111, %p112
      %p114 = scmp.ne.s32.totalorder %s100, %s101
      %p115 = scmp.eq.s32.totalorder %s22, 7
      %p116 = por %p114, %p115
      %p118 = scmp.ne.s32.totalorder %s101, %s117
      %p119 = scmp.eq.s32.totalorder %s22, 0
      %p120 = por %p118, %p119
      %s121 = ssub.s32 %s23, %s42
      %s122 = ssub.s32 %s25, %s34
      %s123 = sor.u32 %s121, %s122
      %s124 = ssub.s32 %s24, %s38
      %s125 = sor.u32 %s123, %s124
      %p126 = scmp.eq.s32.totalorder %s125, 0
      %s128 = sadd.s32 %s127, 1
      %s129 = scalar_select %p126, %s127, %s128
      %p132 = pneg %p126
      %p133 = scmp.eq.s32.totalorder %s16, 7
      %p134 = por %p132, %p133
      %p135 = scmp.ne.s32.totalorder %s127, %s130
      %p136 = scmp.eq.s32.totalorder %s16, 0
      %p137 = por %p135, %p136
      %p138 = scmp.ne.s32.totalorder %s127, %s130
      %p139 = scmp.eq.s32.totalorder %s21, 7
      %p140 = por %p138, %p139
      %p141 = scmp.ne.s32.totalorder %s130, %s131
      %p142 = scmp.eq.s32.totalorder %s21, 0
      %p143 = por %p141, %p142
      %p144 = scmp.ne.s32.totalorder %s130, %s131
      %p145 = scmp.eq.s32.totalorder %s22, 7
      %p146 = por %p144, %p145
      %p148 = scmp.ne.s32.totalorder %s131, %s147
      %p149 = scmp.eq.s32.totalorder %s22, 0
      %p150 = por %p148, %p149
      %p151 = scmp.le.s32.totalorder 1, %s16
      %p152 = scmp.lt.s32.totalorder %s16, 9
      %p153 = pnand %p151, %p152
      %p154 = pneg %p153
      // Predicated region
      $region9: #{tpu_custom_call.1} parent=5 // pred_check
        _
      $region10: #{tpu_custom_call.1} parent=5 // pred_check_branch
        %156 = sbr.rel (%p153) target = $region12
      $region11: #{tpu_custom_call.1} parent=5 // pred_region
        %s157 = ssub.s32 %s16, 1
        // Predicated region
        $region13: #{tpu_custom_call.1} parent=11 // pred_check
          %p158 = pneg %p87
        $region14: #{tpu_custom_call.1} parent=11 // pred_check_branch
          %160 = sbr.rel (%p158) target = $region16
        $region15: #{tpu_custom_call.1} parent=11 // pred_region
          %s162 = ssub.s32 1152, 1152
          %163 = vsyncadd [#allocation6], %s162
          %s164 = smul.addr %s27, 128
          %s165 = scalar_lea.hbm %s1, %s164
          %s166 = sshll.u32 [#allocation5], 4
          %s167 = int_to_ptr.vmem [resolvable:$true] %s166
          %172 = dma.hbm_to_vmem [thread:$0]  %s165, 1152, %s167, [#allocation6], 128, 128, 8
        $region16: #{tpu_custom_call.1} parent=11 // pred_fallthru
          _
        // Predicated region
        $region17: #{tpu_custom_call.1} parent=11 // pred_check
          %p173 = pneg %p113
        $region18: #{tpu_custom_call.1} parent=11 // pred_check_branch
          %175 = sbr.rel (%p173) target = $region20
        $region19: #{tpu_custom_call.1} parent=11 // pred_region
          %p176 = scmp.lt.s32.totalorder %s27, 0
          %s177 = scalar_select %p176, %s27, 0
          %s178 = scalar_lea.vmem %s2, %s177
        $region20: #{tpu_custom_call.1} parent=11 // pred_fallthru
          _
      $region12: #{tpu_custom_call.1} parent=5 // pred_fallthru
        _
      %p179 = scmp.lt.s32.totalorder %s16, 8
      // Predicated region
      $region21: #{tpu_custom_call.1} parent=5 // pred_check
        %p180 = pneg %p179
      $region22: #{tpu_custom_call.1} parent=5 // pred_check_branch
        %182 = sbr.rel (%p180) target = $region24
      $region23: #{tpu_custom_call.1} parent=5 // pred_region
        // Predicated region
        $region25: #{tpu_custom_call.1} parent=23 // pred_check
          %p183 = pneg %p55
        $region26: #{tpu_custom_call.1} parent=23 // pred_check_branch
          %185 = sbr.rel (%p183) target = $region28
        $region27: #{tpu_custom_call.1} parent=23 // pred_region
          %s186 = sand.u32 %s45, 1
          %s187 = scalar_lea.sflag [#allocation3], %s186
          %s188 = sand.u32 %s45, 1
          %s189 = smul.addr %s188, 288
          %s190 = scalar_lea.vmem [#allocation2], %s189
          %s192 = ssub.s32 4608, 4608
          %193 = vsyncadd %s187, %s192
          %s194 = smul.addr %s23, 36
          %s195 = smul.addr %s194, 128
          %s196 = scalar_lea.hbm %s0, %s195
          %s197 = sshll.u32 %s190, 4
          %s198 = int_to_ptr.vmem [resolvable:$true] %s197
          %203 = dma.hbm_to_vmem [thread:$0]  %s196, 4608, %s198, %s187, 128, 128, 8
        $region28: #{tpu_custom_call.1} parent=23 // pred_fallthru
          _
      $region24: #{tpu_custom_call.1} parent=5 // pred_fallthru
        _
      %p204 = scmp.le.s32.totalorder 1, %s16
      %p205 = scmp.lt.s32.totalorder %s16, 9
      %p206 = pnand %p204, %p205
      %p207 = pneg %p206
      // Predicated region
      $region29: #{tpu_custom_call.1} parent=5 // pred_check
        _
      $region30: #{tpu_custom_call.1} parent=5 // pred_check_branch
        %209 = sbr.rel (%p206) target = $region32
      $region31: #{tpu_custom_call.1} parent=5 // pred_region
        %s210 = ssub.s32 %s16, 1
        %s211 = sand.u32 %s48, 1
        %s212 = scalar_lea.sflag [#allocation3], %s211
        %s213 = sand.u32 %s48, 1
        %s214 = smul.addr %s213, 288
        %s215 = scalar_lea.vmem [#allocation2], %s214
        // Predicated region
        $region33: #{tpu_custom_call.1} parent=31 // pred_check
          %p216 = pneg %p61
        $region34: #{tpu_custom_call.1} parent=31 // pred_check_branch
          %218 = sbr.rel (%p216) target = $region36
        $region35: #{tpu_custom_call.1} parent=31 // pred_region
          %219 = dma.done %s212, 4608
        $region36: #{tpu_custom_call.1} parent=31 // pred_fallthru
          _
        // Predicated region
        $region37: #{tpu_custom_call.1} parent=31 // pred_check
          %p220 = pneg %p87
        $region38: #{tpu_custom_call.1} parent=31 // pred_check_branch
          %222 = sbr.rel (%p220) target = $region40
        $region39: #{tpu_custom_call.1} parent=31 // pred_region
          %223 = dma.done [#allocation6], 1152
        $region40: #{tpu_custom_call.1} parent=31 // pred_fallthru
          _
        %s224 = sand.u32 %s48, 1
        %s225 = scalar_lea.sflag [#allocation3], %s224
        %s226 = sand.u32 %s48, 1
        %s227 = smul.addr %s226, 288
        %s228 = scalar_lea.vmem [#allocation2], %s227
        %p229 = pneg %p61
        %p230 = pneg %p58
        %p231 = pneg %p87
        %p232 = pneg %p84
        %p233 = scmp.lt.s32.totalorder %s27, 0
        %s234 = scalar_select %p233, %s27, 0
        %s235 = scalar_lea.vmem %s2, %s234
        %p236 = pneg %p113
        %p237 = pneg %p110
        %p238 = pneg %p143
        %p239 = pneg %p140
        %s240 = sand.u32 %s130, 1
        %s241 = scalar_lea.sflag [#allocation4], %s240
        %s242 = sand.u32 %s130, 1
        %s243 = smul.addr %s242, 64
        %s244 = scalar_lea.vmem [#allocation7], %s243
        %p245 = scmp.lt.s32.totalorder %s27, 0
        %s246 = scalar_select %p245, %s27, 0
        %s247 = scalar_lea.vmem %s2, %s246
        %s248 = smul.u32 4, %s28
        %s249 = smul.u32 %s28, 4
        %s250 = smul.u32 %s249, 16
        %s251 = scalar_lea.vmem %s215, %s250 [#allocation2]
        %v252 = vld [vmem:[%s251] sm:$0xff]
        %v253 = vld [vmem:[%s251 + $0x8] sm:$0xff]
        %v254 = vld [vmem:[%s251 + $0x10] sm:$0xff]
        %v255 = vld [vmem:[%s251 + $0x18] sm:$0xff]
        %v256 = vld [vmem:[%s251 + $0x20] sm:$0xff]
        %v257 = vld [vmem:[%s251 + $0x28] sm:$0xff]
        %v258 = vld [vmem:[%s251 + $0x30] sm:$0xff]
        %v259 = vld [vmem:[%s251 + $0x38] sm:$0xff]
        %v260 = vld [vmem:[#allocation5] sm:$0xff]
        %v261 = vld [vmem:[#allocation5 + $0x8] sm:$0xff]
        %v262 = vld [vmem:[#allocation5 + $0x10] sm:$0xff]
        %s263 = sadd.s32 %s249, 1
        %s264 = smul.u32 %s263, 16
        %s265 = scalar_lea.vmem %s215, %s264 [#allocation2]
        %v266 = vld [vmem:[%s265] sm:$0xff]
        %v267 = vld [vmem:[%s265 + $0x8] sm:$0xff]
        %v268 = vld [vmem:[%s265 + $0x10] sm:$0xff]
        %v269 = vld [vmem:[%s265 + $0x18] sm:$0xff]
        %v270 = vld [vmem:[%s265 + $0x20] sm:$0xff]
        %v271 = vld [vmem:[%s265 + $0x28] sm:$0xff]
        %v272 = vld [vmem:[%s265 + $0x30] sm:$0xff]
        %v273 = vld [vmem:[%s265 + $0x38] sm:$0xff]
        %s274 = scalar_lea.vmem [#allocation5], 24
        %v275 = vld [vmem:[%s274] sm:$0xff]
        %v276 = vld [vmem:[%s274 + $0x8] sm:$0xff]
        %v277 = vld [vmem:[%s274 + $0x10] sm:$0xff]
        %vm278 = vcmask 195584
        %v280 = vsel %vm278, %v266, 0
        %v283 = vsel %vm278, %v267, 0
        %v286 = vsel %vm278, %v268, 0
        %v289 = vsel %vm278, %v269, 0
        %v292 = vsel %vm278, %v270, 0
        %v295 = vsel %vm278, %v271, 0
        %v298 = vsel %vm278, %v272, 0
        %v301 = vsel %vm278, %v273, 0
        %303 = vmatprep.subr.mxu0 0.0
        %304 = vmatpush1.msra.mxu0 0.0
        %305 = vmatprep.subr.mxu0 0.0
        %306 = vmatpush1.msra.mxu0 0.0
        %307 = vmatprep.subr.mxu0 0.0
        %308 = vmatpush1.msra.mxu0 0.0
        %309 = vmatprep.subr.mxu0 0.0
        %310 = vmatpush1.msra.mxu0 0.0
        %311 = vmatprep.subr.mxu0 0.0
        %312 = vmatpush1.msra.mxu0 0.0
        %313 = vmatprep.subr.mxu0 0.0
        %314 = vmatpush1.msra.mxu0 0.0
        %315 = vmatprep.subr.mxu0 0.0
        %316 = vmatpush1.msra.mxu0 0.0
        %317 = vmatprep.subr.mxu0 0.0
        %318 = vmatpush1.msra.mxu0 0.0
        %319 = vmatprep.subr.mxu0 0.0
        %320 = vmatpush1.msra.mxu0 0.0
        %321 = vmatprep.subr.mxu0 0.0
        %322 = vmatpush1.msra.mxu0 0.0
        %323 = vmatprep.subr.mxu0 0.0
        %324 = vmatpush1.msra.mxu0 0.0
        %325 = vmatprep.subr.mxu0 0.0
        %326 = vmatpush1.msra.mxu0 0.0
        %327 = vmatprep.subr.mxu0 0.0
        %328 = vmatpush1.msra.mxu0 0.0
        %329 = vmatprep.subr.mxu0 0.0
        %330 = vmatpush1.msra.mxu0 %v277
        %331 = vmatprep.subr.mxu0 0.0
        %332 = vmatpush1.msra.mxu0 %v276
        %333 = vmatprep.subr.mxu0 0.0
        %334 = vmatpush1.msra.mxu0 %v275
        %335 = vmatprep.subr.mxu0 0.0
        %336 = vmatpush2.msra.mxu0 0.0
        %337 = vmatprep.subr.mxu0 0.0
        %338 = vmatpush2.msra.mxu0 0.0
        %339 = vmatprep.subr.mxu0 0.0
        %340 = vmatpush2.msra.mxu0 0.0
        %341 = vmatprep.subr.mxu0 0.0
        %342 = vmatpush2.msra.mxu0 0.0
        %343 = vmatprep.subr.mxu0 0.0
        %344 = vmatpush2.msra.mxu0 0.0
        %345 = vmatprep.subr.mxu0 0.0
        %346 = vmatpush2.msra.mxu0 0.0
        %347 = vmatprep.subr.mxu0 0.0
        %348 = vmatpush2.msra.mxu0 0.0
        %349 = vmatprep.subr.mxu0 0.0
        %350 = vmatpush2.msra.mxu0 0.0
        %351 = vmatprep.subr.mxu0 0.0
        %352 = vmatpush2.msra.mxu0 0.0
        %353 = vmatprep.subr.mxu0 0.0
        %354 = vmatpush2.msra.mxu0 0.0
        %355 = vmatprep.subr.mxu0 0.0
        %356 = vmatpush2.msra.mxu0 0.0
        %357 = vmatprep.subr.mxu0 0.0
        %358 = vmatpush2.msra.mxu0 0.0
        %359 = vmatprep.subr.mxu0 0.0
        %360 = vmatpush2.msra.mxu0 0.0
        %361 = vmatprep.subr.mxu0 0.0
        %362 = vmatpush2.msra.mxu0 0.0
        %363 = vmatprep.subr.mxu0 0.0
        %364 = vmatpush2.msra.mxu0 0.0
        %365 = vmatprep.subr.mxu0 0.0
        %366 = vmatpush2.msra.mxu0 0.0
        %367 = vmatprep.mubr.f32.mxu0 0.0
        %368 = vmatmul.mubr.f32.gmra.mxu0 %v280
        %v369 = vpop.f32.mrf.mxu0
        %v370 = vadd.f32 0.0, %v369
        %v371 = vpop.f32.mrf.mxu0
        %372 = vmatprep.mubr.f32.mxu0 0.0
        %373 = vmatmul.mubr.f32.gmra.mxu0 %v283
        %v374 = vpop.f32.mrf.mxu0
        %v375 = vadd.f32 0.0, %v374
        %v376 = vpop.f32.mrf.mxu0
        %377 = vmatprep.mubr.f32.mxu0 0.0
        %378 = vmatmul.mubr.f32.gmra.mxu0 %v286
        %v379 = vpop.f32.mrf.mxu0
        %v380 = vadd.f32 0.0, %v379
        %v381 = vpop.f32.mrf.mxu0
        %382 = vmatprep.mubr.f32.mxu0 0.0
        %383 = vmatmul.mubr.f32.gmra.mxu0 %v289
        %v384 = vpop.f32.mrf.mxu0
        %v385 = vadd.f32 0.0, %v384
        %v386 = vpop.f32.mrf.mxu0
        %387 = vmatprep.mubr.f32.mxu0 0.0
        %388 = vmatmul.mubr.f32.gmra.mxu0 %v292
        %v389 = vpop.f32.mrf.mxu0
        %v390 = vadd.f32 0.0, %v389
        %v391 = vpop.f32.mrf.mxu0
        %392 = vmatprep.mubr.f32.mxu0 0.0
        %393 = vmatmul.mubr.f32.gmra.mxu0 %v295
        %v394 = vpop.f32.mrf.mxu0
        %v395 = vadd.f32 0.0, %v394
        %v396 = vpop.f32.mrf.mxu0
        %397 = vmatprep.mubr.f32.mxu0 0.0
        %398 = vmatmul.mubr.f32.gmra.mxu0 %v298
        %v399 = vpop.f32.mrf.mxu0
        %v400 = vadd.f32 0.0, %v399
        %v401 = vpop.f32.mrf.mxu0
        %402 = vmatprep.mubr.f32.mxu0 0.0
        %403 = vmatmul.mubr.f32.gmra.mxu0 %v301
        %v404 = vpop.f32.mrf.mxu0
        %v405 = vadd.f32 0.0, %v404
        %v406 = vpop.f32.mrf.mxu0
        %407 = vdwg.mxu0
        %v409 = vsel %vm278, %v252, 0
        %v412 = vsel %vm278, %v253, 0
        %v415 = vsel %vm278, %v254, 0
        %v418 = vsel %vm278, %v255, 0
        %v421 = vsel %vm278, %v256, 0
        %v424 = vsel %vm278, %v257, 0
        %v427 = vsel %vm278, %v258, 0
        %v430 = vsel %vm278, %v259, 0
        %432 = vmatprep.subr.mxu0 0.0
        %433 = vmatpush1.msra.mxu0 0.0
        %434 = vmatprep.subr.mxu0 0.0
        %435 = vmatpush1.msra.mxu0 0.0
        %436 = vmatprep.subr.mxu0 0.0
        %437 = vmatpush1.msra.mxu0 0.0
        %438 = vmatprep.subr.mxu0 0.0
        %439 = vmatpush1.msra.mxu0 0.0
        %440 = vmatprep.subr.mxu0 0.0
        %441 = vmatpush1.msra.mxu0 0.0
        %442 = vmatprep.subr.mxu0 0.0
        %443 = vmatpush1.msra.mxu0 0.0
        %444 = vmatprep.subr.mxu0 0.0
        %445 = vmatpush1.msra.mxu0 0.0
        %446 = vmatprep.subr.mxu0 0.0
        %447 = vmatpush1.msra.mxu0 0.0
        %448 = vmatprep.subr.mxu0 0.0
        %449 = vmatpush1.msra.mxu0 0.0
        %450 = vmatprep.subr.mxu0 0.0
        %451 = vmatpush1.msra.mxu0 0.0
        %452 = vmatprep.subr.mxu0 0.0
        %453 = vmatpush1.msra.mxu0 0.0
        %454 = vmatprep.subr.mxu0 0.0
        %455 = vmatpush1.msra.mxu0 0.0
        %456 = vmatprep.subr.mxu0 0.0
        %457 = vmatpush1.msra.mxu0 0.0
        %458 = vmatprep.subr.mxu0 0.0
        %459 = vmatpush1.msra.mxu0 %v262
        %460 = vmatprep.subr.mxu0 0.0
        %461 = vmatpush1.msra.mxu0 %v261
        %462 = vmatprep.subr.mxu0 0.0
        %463 = vmatpush1.msra.mxu0 %v260
        %464 = vmatprep.subr.mxu0 0.0
        %465 = vmatpush2.msra.mxu0 0.0
        %466 = vmatprep.subr.mxu0 0.0
        %467 = vmatpush2.msra.mxu0 0.0
        %468 = vmatprep.subr.mxu0 0.0
        %469 = vmatpush2.msra.mxu0 0.0
        %470 = vmatprep.subr.mxu0 0.0
        %471 = vmatpush2.msra.mxu0 0.0
        %472 = vmatprep.subr.mxu0 0.0
        %473 = vmatpush2.msra.mxu0 0.0
        %474 = vmatprep.subr.mxu0 0.0
        %475 = vmatpush2.msra.mxu0 0.0
        %476 = vmatprep.subr.mxu0 0.0
        %477 = vmatpush2.msra.mxu0 0.0
        %478 = vmatprep.subr.mxu0 0.0
        %479 = vmatpush2.msra.mxu0 0.0
        %480 = vmatprep.subr.mxu0 0.0
        %481 = vmatpush2.msra.mxu0 0.0
        %482 = vmatprep.subr.mxu0 0.0
        %483 = vmatpush2.msra.mxu0 0.0
        %484 = vmatprep.subr.mxu0 0.0
        %485 = vmatpush2.msra.mxu0 0.0
        %486 = vmatprep.subr.mxu0 0.0
        %487 = vmatpush2.msra.mxu0 0.0
        %488 = vmatprep.subr.mxu0 0.0
        %489 = vmatpush2.msra.mxu0 0.0
        %490 = vmatprep.subr.mxu0 0.0
        %491 = vmatpush2.msra.mxu0 0.0
        %492 = vmatprep.subr.mxu0 0.0
        %493 = vmatpush2.msra.mxu0 0.0
        %494 = vmatprep.subr.mxu0 0.0
        %495 = vmatpush2.msra.mxu0 0.0
        %496 = vmatprep.mubr.f32.mxu0 0.0
        %497 = vmatmul.mubr.f32.gmra.mxu0 %v409
        %v498 = vpop.f32.mrf.mxu0
        %v499 = vadd.f32 %v370, %v498
        %v500 = vpop.f32.mrf.mxu0
        %501 = vmatprep.mubr.f32.mxu0 0.0
        %502 = vmatmul.mubr.f32.gmra.mxu0 %v412
        %v503 = vpop.f32.mrf.mxu0
        %v504 = vadd.f32 %v375, %v503
        %v505 = vpop.f32.mrf.mxu0
        %506 = vmatprep.mubr.f32.mxu0 0.0
        %507 = vmatmul.mubr.f32.gmra.mxu0 %v415
        %v508 = vpop.f32.mrf.mxu0
        %v509 = vadd.f32 %v380, %v508
        %v510 = vpop.f32.mrf.mxu0
        %511 = vmatprep.mubr.f32.mxu0 0.0
        %512 = vmatmul.mubr.f32.gmra.mxu0 %v418
        %v513 = vpop.f32.mrf.mxu0
        %v514 = vadd.f32 %v385, %v513
        %v515 = vpop.f32.mrf.mxu0
        %516 = vmatprep.mubr.f32.mxu0 0.0
        %517 = vmatmul.mubr.f32.gmra.mxu0 %v421
        %v518 = vpop.f32.mrf.mxu0
        %v519 = vadd.f32 %v390, %v518
        %v520 = vpop.f32.mrf.mxu0
        %521 = vmatprep.mubr.f32.mxu0 0.0
        %522 = vmatmul.mubr.f32.gmra.mxu0 %v424
        %v523 = vpop.f32.mrf.mxu0
        %v524 = vadd.f32 %v395, %v523
        %v525 = vpop.f32.mrf.mxu0
        %526 = vmatprep.mubr.f32.mxu0 0.0
        %527 = vmatmul.mubr.f32.gmra.mxu0 %v427
        %v528 = vpop.f32.mrf.mxu0
        %v529 = vadd.f32 %v400, %v528
        %v530 = vpop.f32.mrf.mxu0
        %531 = vmatprep.mubr.f32.mxu0 0.0
        %532 = vmatmul.mubr.f32.gmra.mxu0 %v430
        %v533 = vpop.f32.mrf.mxu0
        %v534 = vadd.f32 %v405, %v533
        %v535 = vpop.f32.mrf.mxu0
        %536 = vdwg.mxu0
        %s537 = sadd.s32 %s249, 2
        %s538 = smul.u32 %s537, 16
        %s539 = scalar_lea.vmem %s215, %s538 [#allocation2]
        %v540 = vld [vmem:[%s539] sm:$0xff]
        %v541 = vld [vmem:[%s539 + $0x8] sm:$0xff]
        %v542 = vld [vmem:[%s539 + $0x10] sm:$0xff]
        %v543 = vld [vmem:[%s539 + $0x18] sm:$0xff]
        %v544 = vld [vmem:[%s539 + $0x20] sm:$0xff]
        %v545 = vld [vmem:[%s539 + $0x28] sm:$0xff]
        %v546 = vld [vmem:[%s539 + $0x30] sm:$0xff]
        %v547 = vld [vmem:[%s539 + $0x38] sm:$0xff]
        %s548 = scalar_lea.vmem [#allocation5], 48
        %v549 = vld [vmem:[%s548] sm:$0xff]
        %v550 = vld [vmem:[%s548 + $0x8] sm:$0xff]
        %v551 = vld [vmem:[%s548 + $0x10] sm:$0xff]
        %v553 = vsel %vm278, %v540, 0
        %v556 = vsel %vm278, %v541, 0
        %v559 = vsel %vm278, %v542, 0
        %v562 = vsel %vm278, %v543, 0
        %v565 = vsel %vm278, %v544, 0
        %v568 = vsel %vm278, %v545, 0
        %v571 = vsel %vm278, %v546, 0
        %v574 = vsel %vm278, %v547, 0
        %576 = vmatprep.subr.mxu0 0.0
        %577 = vmatpush1.msra.mxu0 0.0
        %578 = vmatprep.subr.mxu0 0.0
        %579 = vmatpush1.msra.mxu0 0.0
        %580 = vmatprep.subr.mxu0 0.0
        %581 = vmatpush1.msra.mxu0 0.0
        %582 = vmatprep.subr.mxu0 0.0
        %583 = vmatpush1.msra.mxu0 0.0
        %584 = vmatprep.subr.mxu0 0.0
        %585 = vmatpush1.msra.mxu0 0.0
        %586 = vmatprep.subr.mxu0 0.0
        %587 = vmatpush1.msra.mxu0 0.0
        %588 = vmatprep.subr.mxu0 0.0
        %589 = vmatpush1.msra.mxu0 0.0
        %590 = vmatprep.subr.mxu0 0.0
        %591 = vmatpush1.msra.mxu0 0.0
        %592 = vmatprep.subr.mxu0 0.0
        %593 = vmatpush1.msra.mxu0 0.0
        %594 = vmatprep.subr.mxu0 0.0
        %595 = vmatpush1.msra.mxu0 0.0
        %596 = vmatprep.subr.mxu0 0.0
        %597 = vmatpush1.msra.mxu0 0.0
        %598 = vmatprep.subr.mxu0 0.0
        %599 = vmatpush1.msra.mxu0 0.0
        %600 = vmatprep.subr.mxu0 0.0
        %601 = vmatpush1.msra.mxu0 0.0
        %602 = vmatprep.subr.mxu0 0.0
        %603 = vmatpush1.msra.mxu0 %v551
        %604 = vmatprep.subr.mxu0 0.0
        %605 = vmatpush1.msra.mxu0 %v550
        %606 = vmatprep.subr.mxu0 0.0
        %607 = vmatpush1.msra.mxu0 %v549
        %608 = vmatprep.subr.mxu0 0.0
        %609 = vmatpush2.msra.mxu0 0.0
        %610 = vmatprep.subr.mxu0 0.0
        %611 = vmatpush2.msra.mxu0 0.0
        %612 = vmatprep.subr.mxu0 0.0
        %613 = vmatpush2.msra.mxu0 0.0
        %614 = vmatprep.subr.mxu0 0.0
        %615 = vmatpush2.msra.mxu0 0.0
        %616 = vmatprep.subr.mxu0 0.0
        %617 = vmatpush2.msra.mxu0 0.0
        %618 = vmatprep.subr.mxu0 0.0
        %619 = vmatpush2.msra.mxu0 0.0
        %620 = vmatprep.subr.mxu0 0.0
        %621 = vmatpush2.msra.mxu0 0.0
        %622 = vmatprep.subr.mxu0 0.0
        %623 = vmatpush2.msra.mxu0 0.0
        %624 = vmatprep.subr.mxu0 0.0
        %625 = vmatpush2.msra.mxu0 0.0
        %626 = vmatprep.subr.mxu0 0.0
        %627 = vmatpush2.msra.mxu0 0.0
        %628 = vmatprep.subr.mxu0 0.0
        %629 = vmatpush2.msra.mxu0 0.0
        %630 = vmatprep.subr.mxu0 0.0
        %631 = vmatpush2.msra.mxu0 0.0
        %632 = vmatprep.subr.mxu0 0.0
        %633 = vmatpush2.msra.mxu0 0.0
        %634 = vmatprep.subr.mxu0 0.0
        %635 = vmatpush2.msra.mxu0 0.0
        %636 = vmatprep.subr.mxu0 0.0
        %637 = vmatpush2.msra.mxu0 0.0
        %638 = vmatprep.subr.mxu0 0.0
        %639 = vmatpush2.msra.mxu0 0.0
        %640 = vmatprep.mubr.f32.mxu0 0.0
        %641 = vmatmul.mubr.f32.gmra.mxu0 %v553
        %v642 = vpop.f32.mrf.mxu0
        %v643 = vadd.f32 0.0, %v642
        %v644 = vpop.f32.mrf.mxu0
        %645 = vmatprep.mubr.f32.mxu0 0.0
        %646 = vmatmul.mubr.f32.gmra.mxu0 %v556
        %v647 = vpop.f32.mrf.mxu0
        %v648 = vadd.f32 0.0, %v647
        %v649 = vpop.f32.mrf.mxu0
        %650 = vmatprep.mubr.f32.mxu0 0.0
        %651 = vmatmul.mubr.f32.gmra.mxu0 %v559
        %v652 = vpop.f32.mrf.mxu0
        %v653 = vadd.f32 0.0, %v652
        %v654 = vpop.f32.mrf.mxu0
        %655 = vmatprep.mubr.f32.mxu0 0.0
        %656 = vmatmul.mubr.f32.gmra.mxu0 %v562
        %v657 = vpop.f32.mrf.mxu0
        %v658 = vadd.f32 0.0, %v657
        %v659 = vpop.f32.mrf.mxu0
        %660 = vmatprep.mubr.f32.mxu0 0.0
        %661 = vmatmul.mubr.f32.gmra.mxu0 %v565
        %v662 = vpop.f32.mrf.mxu0
        %v663 = vadd.f32 0.0, %v662
        %v664 = vpop.f32.mrf.mxu0
        %665 = vmatprep.mubr.f32.mxu0 0.0
        %666 = vmatmul.mubr.f32.gmra.mxu0 %v568
        %v667 = vpop.f32.mrf.mxu0
        %v668 = vadd.f32 0.0, %v667
        %v669 = vpop.f32.mrf.mxu0
        %670 = vmatprep.mubr.f32.mxu0 0.0
        %671 = vmatmul.mubr.f32.gmra.mxu0 %v571
        %v672 = vpop.f32.mrf.mxu0
        %v673 = vadd.f32 0.0, %v672
        %v674 = vpop.f32.mrf.mxu0
        %675 = vmatprep.mubr.f32.mxu0 0.0
        %676 = vmatmul.mubr.f32.gmra.mxu0 %v574
        %v677 = vpop.f32.mrf.mxu0
        %v678 = vadd.f32 0.0, %v677
        %v679 = vpop.f32.mrf.mxu0
        %680 = vdwg.mxu0
        %v681 = vadd.f32 %v499, %v643
        %v682 = vadd.f32 %v504, %v648
        %v683 = vadd.f32 %v509, %v653
        %v684 = vadd.f32 %v514, %v658
        %v685 = vadd.f32 %v519, %v663
        %v686 = vadd.f32 %v524, %v668
        %v687 = vadd.f32 %v529, %v673
        %v688 = vadd.f32 %v534, %v678
        %v689 = vld [vmem:[%s247] sm:$0x1]
        %v691 = vlaneseq
        %v692 = vshrl.u32 %v691, 7
        %v693 = vsub.s32 0, %v692
        %v694 = vrot.slane %v689, %v693
        %v696 = vadd.f32 %v681, %v694
        %v697 = vadd.f32 %v682, %v694
        %v698 = vadd.f32 %v683, %v694
        %v699 = vadd.f32 %v684, %v694
        %v700 = vadd.f32 %v685, %v694
        %v701 = vadd.f32 %v686, %v694
        %v702 = vadd.f32 %v687, %v694
        %v703 = vadd.f32 %v688, %v694
        %v704 = vmax.f32 %v696, 0.0
        %v705 = vmax.f32 %v697, 0.0
        %v706 = vmax.f32 %v698, 0.0
        %v707 = vmax.f32 %v699, 0.0
        %v708 = vmax.f32 %v700, 0.0
        %v709 = vmax.f32 %v701, 0.0
        %v710 = vmax.f32 %v702, 0.0
        %v711 = vmax.f32 %v703, 0.0
        %712 = vst [vmem:[%s244] sm:$0xff] %v704
        %713 = vst [vmem:[%s244 + $0x8] sm:$0xff] %v705
        %714 = vst [vmem:[%s244 + $0x10] sm:$0xff] %v706
        %715 = vst [vmem:[%s244 + $0x18] sm:$0xff] %v707
        %716 = vst [vmem:[%s244 + $0x20] sm:$0xff] %v708
        %717 = vst [vmem:[%s244 + $0x28] sm:$0xff] %v709
        %718 = vst [vmem:[%s244 + $0x30] sm:$0xff] %v710
        %719 = vst [vmem:[%s244 + $0x38] sm:$0xff] %v711
        %s720 = sand.u32 %s130, 1
        %s721 = scalar_lea.sflag [#allocation4], %s720
        %s722 = sand.u32 %s130, 1
        %s723 = smul.addr %s722, 64
        %s724 = scalar_lea.vmem [#allocation7], %s723
        // Predicated region
        $region41: #{tpu_custom_call.1} parent=31 // pred_check
          %p725 = pneg %p140
        $region42: #{tpu_custom_call.1} parent=31 // pred_check_branch
          %727 = sbr.rel (%p725) target = $region44
        $region43: #{tpu_custom_call.1} parent=31 // pred_region
          %s728 = smul.u32 4, %s28
          %s730 = ssub.s32 1024, 1024
          %731 = vsyncadd %s721, %s730
          %s732 = smul.addr %s728, 2
          %s733 = sadd.s32 %s27, %s732
          %s734 = smul.addr %s26, 32
          %s735 = sadd.s32 %s733, %s734
          %s736 = smul.addr %s735, 128
          %s737 = scalar_lea.hbm %s3, %s736
          %s738 = sshll.u32 %s724, 4
          %s739 = int_to_ptr.vmem [resolvable:$true] %s738
          %744 = dma.vmem_to_hbm [thread:$0]  %s739, 1024, %s737, %s721, 128, 128, 8
        $region44: #{tpu_custom_call.1} parent=31 // pred_fallthru
          _
      $region32: #{tpu_custom_call.1} parent=5 // pred_fallthru
        _
      %p745 = scmp.le.s32.totalorder 2, %s16
      // Predicated region
      $region45: #{tpu_custom_call.1} parent=5 // pred_check
        %p746 = pneg %p745
      $region46: #{tpu_custom_call.1} parent=5 // pred_check_branch
        %748 = sbr.rel (%p746) target = $region48
      $region47: #{tpu_custom_call.1} parent=5 // pred_region
        %s749 = ssub.s32 %s16, 2
        // Predicated region
        $region49: #{tpu_custom_call.1} parent=47 // pred_check
          %p750 = pneg %p146
        $region50: #{tpu_custom_call.1} parent=47 // pred_check_branch
          %752 = sbr.rel (%p750) target = $region52
        $region51: #{tpu_custom_call.1} parent=47 // pred_region
          %s753 = sand.u32 %s131, 1
          %s754 = scalar_lea.sflag [#allocation4], %s753
          %s755 = sand.u32 %s131, 1
          %s756 = smul.addr %s755, 64
          %s757 = scalar_lea.vmem [#allocation7], %s756
          %758 = dma.done %s754, 1024
        $region52: #{tpu_custom_call.1} parent=47 // pred_fallthru
          _
      $region48: #{tpu_custom_call.1} parent=5 // pred_fallthru
        _
    $region6: #{tpu_custom_call.1} parent=1 // loop_footer
      %s20 = sadd.s32 1, %s16
    $region7: #{tpu_custom_call.1} parent=1 // loop_footer_branch
      %15 = sbr.rel target = $region3
    $region8: #{tpu_custom_call.1} parent=1 // loop_exit
      _
    %759 = vsyncpa [#allocation3], 1
    %s760 = scalar_lea.sflag [#allocation3], 1
    %761 = vsyncpa %s760, 1
    %762 = vsyncpa [#allocation6], 1
    %763 = vsyncpa [#allocation4], 1
    %s764 = scalar_lea.sflag [#allocation4], 1
    %765 = vsyncpa %s764, 1

</llo_original>
